<compile_context>
chip_gen: v7x
topology: tpu7x:2x2x1
jax: 0.10.0
libtpu: 0.0.40
codegen_flags: <defaults>
</compile_context>

<pallas_src>
import functools

import jax
import jax.numpy as jnp
from jax.experimental import pallas as pl
from jax.experimental.pallas import tpu as pltpu

_LANE = 128
_MIB = 1024 * 1024
_TARGET_STEP_BYTES = 1 * _MIB      # keep per-grid-step HBM traffic above the ~0.35us step cost


def _tpu_generation():
    """Best-effort TPU generation detection ('v5e' / 'v6' / 'v7' / 'unknown')."""
    try:
        kind = jax.devices()[0].device_kind.lower()
    except Exception:
        return "unknown"
    if "v7" in kind:
        return "v7"
    if "v6" in kind or "trillium" in kind:
        return "v6"
    if "v5" in kind and ("lite" in kind or "5e" in kind):
        return "v5e"
    return "unknown"


def _mxu_cin_threshold(gen, dtype):
    """Smallest Cin for which the MXU matmul beats the unrolled VPU FMA chain."""
    if jnp.dtype(dtype) != jnp.dtype(jnp.float32):
        # bf16/fp8 inputs: MXU handles them natively; the VPU chain would up-convert
        # (worst on v5e, which has no bf16 VALU).
        return 0
    if gen == "v7":
        return 0     # ~3.2 TB/s HBM per TC: the VPU FMA chain becomes the binding slot
    if gen == "v6":
        return 8     # Cin>=8 FMA chain exceeds ~100ns of HBM time per step -> use MXU
    return 16        # v5e / unknown: mem-bound; a K<16 MXU matmul is mostly padding


def _vmem_budget(gen):
    """(double-buffered block budget, vmem_limit_bytes) per generation."""
    if gen == "v7":
        return 24 * _MIB, 48 * _MIB    # 64 MiB physical VMEM per TensorCore
    return 40 * _MIB, 64 * _MIB        # 128 MiB physical on v5e / v6e


def _choose_tiling(B, Cin, CF, T128, t_tile, itemsize, block_budget, want_steps):
    """Pick (Bb, Tt): batch-block size and lane-dense time tile.

    Time is only ever padded to a multiple of 128 (by the caller); Tt is chosen to
    divide the 128-padded T exactly, so there are no masked / wasted output tiles.
    """
    col_bytes = (Cin + CF) * itemsize            # HBM bytes per time column (in + out)
    n = T128 // _LANE

    def _largest_dividing_tile(cap_cols):
        d = max(1, min(cap_cols // _LANE, n))
        while n % d != 0:
            d -= 1
        return d * _LANE

    # Largest Tt whose double-buffered (Bb=1) in+out blocks fit the VMEM budget.
    vmem_cols = max(_LANE, ((block_budget // (2 * col_bytes)) // _LANE) * _LANE)
    Tt = _largest_dividing_tile(min(t_tile, vmem_cols))
    t_tiles = T128 // Tt

    # v7x: keep enough grid steps so both TensorCores get work.
    if B * t_tiles < want_steps and n >= want_steps:
        Tt = _largest_dividing_tile(T128 // want_steps)
        t_tiles = T128 // Tt

    # Fold batches when per-step traffic is small (amortizes the fixed step cost),
    # without starving the second core (v7x) or blowing the VMEM budget.
    Bb = 1
    for cand in range(2, B + 1):
        if B % cand:
            continue
        if Bb * Tt * col_bytes >= _TARGET_STEP_BYTES:
            break
        if 2 * cand * Tt * col_bytes > block_budget:
            break
        if (B // cand) * t_tiles < want_steps <= (B // Bb) * t_tiles:
            break
        Bb = cand
    return Bb, Tt


def _conv1x1_kernel(x_ref, w_ref, b_ref, o_ref, *, use_mxu):
    # x_ref: (Bb, Cin, Tt)  w_ref: (CF, Cin)  b_ref: (CF, 1)  o_ref: (Bb, CF, Tt)
    w = w_ref[...]
    b = b_ref[...]
    bb_blk, cin, _ = x_ref.shape
    for bb in range(bb_blk):                       # static unroll; Bb is tiny
        x = x_ref[bb]                              # (Cin, Tt)
        if use_mxu:
            # MXU matmul (hides under the DMA) with f32 accumulation.
            y = jnp.dot(w, x, preferred_element_type=jnp.float32) + b
        else:
            # Tiny contraction dim on mem-bound v5e/v6e: unrolled VPU broadcast-FMA
            # beats a K-padded systolic matmul.
            y = b + w[:, 0:1] * x[0:1, :]
            for i in range(1, cin):
                y = y + w[:, i:i + 1] * x[i:i + 1, :]
        o_ref[bb] = y.astype(o_ref.dtype)


def conv1d_to_2d(x, v, g, bias, freq_dim, *, t_tile=4096,
                 small_fallback_bytes=256 * 1024, force_pallas=False):
    """Conv1DTo2DONNX forward.

    x: (B, Cin, T); v: (CF, Cin, 1); g: (CF, 1, 1); bias: (CF,)  with CF = Cout*freq_dim.
    Returns (B, Cout, freq_dim, T).
    """
    B, Cin, T = x.shape
    CF = v.shape[0]
    Cout = CF // freq_dim

    # weight_norm: W = g * v / ||v||_(dims 1,2) per output channel (tiny; plain JAX).
    # No eps in the denominator, matching torch._weight_norm (all-zero v row -> NaN there too).
    v2 = v[:, :, 0].astype(jnp.float32)
    norm = jnp.sqrt(jnp.sum(v2 * v2, axis=1, keepdims=True))            # (CF, 1)
    w = (g[:, :, 0].astype(jnp.float32) * v2 / norm).astype(x.dtype)    # (CF, Cin)
    b2 = bias[:, None].astype(x.dtype)                                  # (CF, 1)

    itemsize = jnp.dtype(x.dtype).itemsize
    T128 = ((T + _LANE - 1) // _LANE) * _LANE        # pad time only to a lane multiple

    # Tiny problems: the Pallas launch + 128-lane padding is pure overhead; XLA fusion wins.
    if not force_pallas and B * CF * T128 * itemsize < small_fallback_bytes:
        y = jnp.einsum("oi,bit->bot", w, x, precision="highest") + b2[None]
        return y.reshape(B, Cout, freq_dim, T)

    gen = _tpu_generation()
    block_budget, vmem_limit = _vmem_budget(gen)
    want_steps = 2 if gen == "v7" else 1             # keep both v7x TensorCores fed
    use_mxu = Cin >= _mxu_cin_threshold(gen, x.dtype)

    t_tile = max(_LANE, (t_tile // _LANE) * _LANE)
    Bb, Tt = _choose_tiling(B, Cin, CF, T128, t_tile, itemsize, block_budget, want_steps)

    xp = x if T128 == T else jnp.pad(x, ((0, 0), (0, 0), (0, T128 - T)))

    out = pl.pallas_call(
        functools.partial(_conv1x1_kernel, use_mxu=use_mxu),
        out_shape=jax.ShapeDtypeStruct((B, CF, T128), x.dtype),
        grid_spec=pltpu.PrefetchScalarGridSpec(
            num_scalar_prefetch=0,
            grid=(B // Bb, T128 // Tt),
            in_specs=[
                pl.BlockSpec((Bb, Cin, Tt), lambda b, t: (b, 0, t)),   # (batch-block, T-tile) slab
                pl.BlockSpec((CF, Cin), lambda b, t: (0, 0)),          # resident weight
                pl.BlockSpec((CF, 1), lambda b, t: (0, 0)),            # resident bias
            ],
            out_specs=pl.BlockSpec((Bb, CF, Tt), lambda b, t: (b, 0, t)),
        ),
        compiler_params=pltpu.CompilerParams(
            dimension_semantics=("parallel", "parallel"),
            vmem_limit_bytes=vmem_limit,
        ),
    )(xp, w, b2)

    if T128 != T:
        out = out[:, :, :T]

    # (B, CF, T) -> (B, Cout, F, T): same memory order as torch .view
    return out.reshape(B, Cout, freq_dim, T)


def conv1d_to_2d_ref(x, v, g, bias, freq_dim):
    """Pure-JAX (full f32 precision) reference for correctness checking."""
    v2 = v[:, :, 0]
    norm = jnp.sqrt(jnp.sum(v2 * v2, axis=1, keepdims=True))
    w = g[:, :, 0] * v2 / norm                       # (CF, Cin)
    y = jnp.einsum("oi,bit->bot", w, x, precision="highest") + bias[None, :, None]
    B, CF, T = y.shape
    return y.reshape(B, CF // freq_dim, freq_dim, T)


if __name__ == "__main__":
    # Shapes consistent with the module: B=2, in_channels=4, out_channels=4, freq_dim=16.
    B, Cin, Cout, F = 2, 4, 4, 16
    CF = Cout * F

    key = jax.random.PRNGKey(0)
    kx, kv, kg, kb, kx2 = jax.random.split(key, 5)
    v = jax.random.normal(kv, (CF, Cin, 1), dtype=jnp.float32) * 0.1
    g = jax.random.normal(kg, (CF, 1, 1), dtype=jnp.float32)
    bias = jax.random.normal(kb, (CF,), dtype=jnp.float32) * 0.01

    # Tolerance covers generations where the kernel takes the MXU path (multi-pass f32
    # matmul) vs. the exact-f32 VPU path; real indexing/bias bugs would be O(1) off.
    tol = dict(atol=1e-2, rtol=1e-2)

    # 1) Spec-sized small shape (T=16): force the Pallas path so the kernel itself runs.
    T = 16
    x = jax.random.normal(kx, (B, Cin, T), dtype=jnp.float32)
    out = jax.block_until_ready(conv1d_to_2d(x, v, g, bias, F, force_pallas=True))
    ref = conv1d_to_2d_ref(x, v, g, bias, F)
    assert out.shape == (B, Cout, F, T), out.shape
    assert jnp.allclose(out, ref, **tol), "mismatch vs reference (T=16)"

    # 2) A longer, non-128-multiple T to exercise lane padding + tiling on the default path.
    T2 = 1000
    x2 = jax.random.normal(kx2, (B, Cin, T2), dtype=jnp.float32)
    out2 = jax.block_until_ready(conv1d_to_2d(x2, v, g, bias, F))
    ref2 = conv1d_to_2d_ref(x2, v, g, bias, F)
    assert out2.shape == (B, Cout, F, T2), out2.shape
    assert jnp.allclose(out2, ref2, **tol), "mismatch vs reference (T=1000)"

    print("KERNEL_OK")
</pallas_src>

<mosaic_0001>
module attributes {stable_mosaic.version = 11 : i64} {
  func.func @_conv1x1_kernel(%arg0: i32, %arg1: i32, %arg2: memref<2x4x128xf32, #tpu.memory_space<vmem>>, %arg3: memref<64x4xf32, #tpu.memory_space<vmem>>, %arg4: memref<64x1xf32, #tpu.memory_space<vmem>>, %arg5: memref<2x64x128xf32, #tpu.memory_space<vmem>>) attributes {dimension_semantics = [#tpu.dimension_semantics<parallel>, #tpu.dimension_semantics<parallel>], iteration_bounds = array<i64: 1, 1>, scalar_prefetch = 0 : i64, scratch_operands = 0 : i64, tpu.core_type = #tpu.core_type<tc>, window_params = [{transform_indices = @transform_0, window_bounds = array<i64: 2, 4, 128>}, {pipeline_mode = #tpu.pipeline_mode<synchronous>, transform_indices = @transform_1, window_bounds = array<i64: 64, 4>}, {pipeline_mode = #tpu.pipeline_mode<synchronous>, transform_indices = @transform_2, window_bounds = array<i64: 64, 1>}, {transform_indices = @transform_3, window_bounds = array<i64: 2, 64, 128>}]} {
    %c0 = arith.constant 0 : index
    %c0_0 = arith.constant 0 : index
    %0 = vector.load %arg3[%c0, %c0_0] : memref<64x4xf32, #tpu.memory_space<vmem>>, vector<64x4xf32>
    %c0_1 = arith.constant 0 : index
    %c0_2 = arith.constant 0 : index
    %1 = vector.load %arg4[%c0_1, %c0_2] : memref<64x1xf32, #tpu.memory_space<vmem>>, vector<64x1xf32>
    %c0_3 = arith.constant 0 : index
    %c0_4 = arith.constant 0 : index
    %c0_5 = arith.constant 0 : index
    %2 = vector.load %arg2[%c0_3, %c0_4, %c0_5] : memref<2x4x128xf32, #tpu.memory_space<vmem>>, vector<1x4x128xf32>
    %3 = vector.shape_cast %2 : vector<1x4x128xf32> to vector<4x128xf32>
    %4 = vector.extract_strided_slice %0 {offsets = [0, 0], sizes = [64, 1], strides = [1, 1]} : vector<64x4xf32> to vector<64x1xf32>
    %5 = vector.extract_strided_slice %3 {offsets = [0, 0], sizes = [1, 128], strides = [1, 1]} : vector<4x128xf32> to vector<1x128xf32>
    %6 = vector.broadcast %4 : vector<64x1xf32> to vector<64x128xf32>
    %7 = vector.broadcast %5 : vector<1x128xf32> to vector<64x128xf32>
    %8 = arith.mulf %6, %7 : vector<64x128xf32>
    %9 = vector.broadcast %1 : vector<64x1xf32> to vector<64x128xf32>
    %10 = arith.addf %9, %8 : vector<64x128xf32>
    %11 = vector.extract_strided_slice %0 {offsets = [0, 1], sizes = [64, 1], strides = [1, 1]} : vector<64x4xf32> to vector<64x1xf32>
    %12 = vector.extract_strided_slice %3 {offsets = [1, 0], sizes = [1, 128], strides = [1, 1]} : vector<4x128xf32> to vector<1x128xf32>
    %13 = vector.broadcast %11 : vector<64x1xf32> to vector<64x128xf32>
    %14 = vector.broadcast %12 : vector<1x128xf32> to vector<64x128xf32>
    %15 = arith.mulf %13, %14 : vector<64x128xf32>
    %16 = arith.addf %10, %15 : vector<64x128xf32>
    %17 = vector.extract_strided_slice %0 {offsets = [0, 2], sizes = [64, 1], strides = [1, 1]} : vector<64x4xf32> to vector<64x1xf32>
    %18 = vector.extract_strided_slice %3 {offsets = [2, 0], sizes = [1, 128], strides = [1, 1]} : vector<4x128xf32> to vector<1x128xf32>
    %19 = vector.broadcast %17 : vector<64x1xf32> to vector<64x128xf32>
    %20 = vector.broadcast %18 : vector<1x128xf32> to vector<64x128xf32>
    %21 = arith.mulf %19, %20 : vector<64x128xf32>
    %22 = arith.addf %16, %21 : vector<64x128xf32>
    %23 = vector.extract_strided_slice %0 {offsets = [0, 3], sizes = [64, 1], strides = [1, 1]} : vector<64x4xf32> to vector<64x1xf32>
    %24 = vector.extract_strided_slice %3 {offsets = [3, 0], sizes = [1, 128], strides = [1, 1]} : vector<4x128xf32> to vector<1x128xf32>
    %25 = vector.broadcast %23 : vector<64x1xf32> to vector<64x128xf32>
    %26 = vector.broadcast %24 : vector<1x128xf32> to vector<64x128xf32>
    %27 = arith.mulf %25, %26 : vector<64x128xf32>
    %28 = arith.addf %22, %27 : vector<64x128xf32>
    %c0_6 = arith.constant 0 : index
    %c0_7 = arith.constant 0 : index
    %c0_8 = arith.constant 0 : index
    %29 = vector.load %arg5[%c0_6, %c0_7, %c0_8] : memref<2x64x128xf32, #tpu.memory_space<vmem>>, vector<1x64x128xf32>
    %30 = vector.shape_cast %29 : vector<1x64x128xf32> to vector<64x128xf32>
    %31 = vector.shape_cast %28 : vector<64x128xf32> to vector<1x64x128xf32>
    tpu.vector_store %arg5[%c0_6, %c0_7, %c0_8], %31 {strides = array<i32>} : memref<2x64x128xf32, #tpu.memory_space<vmem>>, vector<1x64x128xf32>,
    %c1 = arith.constant 1 : index
    %c0_9 = arith.constant 0 : index
    %c0_10 = arith.constant 0 : index
    %32 = vector.load %arg2[%c1, %c0_9, %c0_10] : memref<2x4x128xf32, #tpu.memory_space<vmem>>, vector<1x4x128xf32>
    %33 = vector.shape_cast %32 : vector<1x4x128xf32> to vector<4x128xf32>
    %34 = vector.extract_strided_slice %0 {offsets = [0, 0], sizes = [64, 1], strides = [1, 1]} : vector<64x4xf32> to vector<64x1xf32>
    %35 = vector.extract_strided_slice %33 {offsets = [0, 0], sizes = [1, 128], strides = [1, 1]} : vector<4x128xf32> to vector<1x128xf32>
    %36 = vector.broadcast %34 : vector<64x1xf32> to vector<64x128xf32>
    %37 = vector.broadcast %35 : vector<1x128xf32> to vector<64x128xf32>
    %38 = arith.mulf %36, %37 : vector<64x128xf32>
    %39 = vector.broadcast %1 : vector<64x1xf32> to vector<64x128xf32>
    %40 = arith.addf %39, %38 : vector<64x128xf32>
    %41 = vector.extract_strided_slice %0 {offsets = [0, 1], sizes = [64, 1], strides = [1, 1]} : vector<64x4xf32> to vector<64x1xf32>
    %42 = vector.extract_strided_slice %33 {offsets = [1, 0], sizes = [1, 128], strides = [1, 1]} : vector<4x128xf32> to vector<1x128xf32>
    %43 = vector.broadcast %41 : vector<64x1xf32> to vector<64x128xf32>
    %44 = vector.broadcast %42 : vector<1x128xf32> to vector<64x128xf32>
    %45 = arith.mulf %43, %44 : vector<64x128xf32>
    %46 = arith.addf %40, %45 : vector<64x128xf32>
    %47 = vector.extract_strided_slice %0 {offsets = [0, 2], sizes = [64, 1], strides = [1, 1]} : vector<64x4xf32> to vector<64x1xf32>
    %48 = vector.extract_strided_slice %33 {offsets = [2, 0], sizes = [1, 128], strides = [1, 1]} : vector<4x128xf32> to vector<1x128xf32>
    %49 = vector.broadcast %47 : vector<64x1xf32> to vector<64x128xf32>
    %50 = vector.broadcast %48 : vector<1x128xf32> to vector<64x128xf32>
    %51 = arith.mulf %49, %50 : vector<64x128xf32>
    %52 = arith.addf %46, %51 : vector<64x128xf32>
    %53 = vector.extract_strided_slice %0 {offsets = [0, 3], sizes = [64, 1], strides = [1, 1]} : vector<64x4xf32> to vector<64x1xf32>
    %54 = vector.extract_strided_slice %33 {offsets = [3, 0], sizes = [1, 128], strides = [1, 1]} : vector<4x128xf32> to vector<1x128xf32>
    %55 = vector.broadcast %53 : vector<64x1xf32> to vector<64x128xf32>
    %56 = vector.broadcast %54 : vector<1x128xf32> to vector<64x128xf32>
    %57 = arith.mulf %55, %56 : vector<64x128xf32>
    %58 = arith.addf %52, %57 : vector<64x128xf32>
    %c1_11 = arith.constant 1 : index
    %c0_12 = arith.constant 0 : index
    %c0_13 = arith.constant 0 : index
    %59 = vector.load %arg5[%c1_11, %c0_12, %c0_13] : memref<2x64x128xf32, #tpu.memory_space<vmem>>, vector<1x64x128xf32>
    %60 = vector.shape_cast %59 : vector<1x64x128xf32> to vector<64x128xf32>
    %61 = vector.shape_cast %58 : vector<64x128xf32> to vector<1x64x128xf32>
    tpu.vector_store %arg5[%c1_11, %c0_12, %c0_13], %61 {strides = array<i32>} : memref<2x64x128xf32, #tpu.memory_space<vmem>>, vector<1x64x128xf32>,
    return
  }
  func.func @transform_0(%arg0: i32, %arg1: i32) -> (i32, i32, i32) {
    %c0_i32 = arith.constant 0 : i32
    %c0_i32_0 = arith.constant 0 : i32
    return %arg0, %c0_i32, %arg1 : i32, i32, i32
  }
  func.func @transform_1(%arg0: i32, %arg1: i32) -> (i32, i32) {
    %c0_i32 = arith.constant 0 : i32
    %c0_i32_0 = arith.constant 0 : i32
    %c0_i32_1 = arith.constant 0 : i32
    return %c0_i32, %c0_i32_0 : i32, i32
  }
  func.func @transform_2(%arg0: i32, %arg1: i32) -> (i32, i32) {
    %c0_i32 = arith.constant 0 : i32
    %c0_i32_0 = arith.constant 0 : i32
    %c0_i32_1 = arith.constant 0 : i32
    return %c0_i32, %c0_i32_0 : i32, i32
  }
  func.func @transform_3(%arg0: i32, %arg1: i32) -> (i32, i32, i32) {
    %c0_i32 = arith.constant 0 : i32
    %c0_i32_0 = arith.constant 0 : i32
    return %arg0, %c0_i32, %arg1 : i32, i32, i32
  }
}

</mosaic_0001>

<llo_original>
// kernel: tpu_custom_call.1
$region0: #{tpu_custom_call.1}
  #allocation0 [shape = 'u32[]', space=smem, size = 0x4, offset = 0x4, fixed_abs, tag = 'smem constant byte address 0x4 - core index']
  #allocation1 [shape = 'u32[144,128]{1,0:T(1,128)}', space=vmem, size = 0x12000, scoped, tag = 'internal scratch']
  %s0 = inlined_call_operand.hbm [shape: f32[2,4,128], index: 0, kind: input, shape index: {}]
  %s1 = inlined_call_operand.hbm [shape: f32[64,4], index: 1, kind: input, shape index: {}]
  %s2 = inlined_call_operand.hbm [shape: f32[64,1], index: 2, kind: input, shape index: {}]
  %s3 = inlined_call_operand.hbm [shape: f32[2,64,128], index: 3, kind: output, shape index: {}]
  %s4 = sld [smem:[#allocation0]]
  $region34: #{tpu_custom_call.1} parent=0
    _
  %s6 = ssub.s32 1, %s4
  %s7 = scalar_select 0, %s6, %s4
  $region1: #{tpu_custom_call.1} parent=0
    #allocation2 [shape = 'u8[4096]{0}', space=vmem, size = 0x1000, scoped, tag = 'input window, operand 0, single buffered']
    #allocation3 [shape = 's32[1]{0}', space=sflag, size = 0x4, scoped, tag = 'scoped memory for tpu_custom_call.1']
    #allocation4 [shape = 's32[1]{0}', space=sflag, size = 0x4, scoped, tag = 'scoped memory for tpu_custom_call.1']
    #allocation5 [shape = 'u8[32768]{0}', space=vmem, size = 0x8000, scoped, tag = 'input window, operand 1, single buffered']
    #allocation6 [shape = 's32[1]{0}', space=sflag, size = 0x4, scoped, tag = 'scoped memory for tpu_custom_call.1']
    #allocation7 [shape = 'u8[32768]{0}', space=vmem, size = 0x8000, scoped, tag = 'input window, operand 2, single buffered']
    #allocation8 [shape = 'u8[65536]{0}', space=vmem, size = 0x10000, scoped, tag = 'output window, operand 0, single buffered']
    %8 = vsyncpa [#allocation3], 0
    %9 = vsyncpa [#allocation6], 0
    %10 = vsyncpa [#allocation4], 0
    // Predicated region
    $region2: #{tpu_custom_call.1} parent=1 // pred_check
      _
    $region3: #{tpu_custom_call.1} parent=1 // pred_check_branch
      %12 = sbr.rel (0) target = $region5
    $region4: #{tpu_custom_call.1} parent=1 // pred_region
      %s14 = ssub.s32 128, 128
      %15 = vsyncadd [#allocation3], %s14
      %s16 = sshll.u32 [#allocation2], 4
      %s17 = int_to_ptr.vmem [resolvable:$true] %s16
      %22 = dma.hbm_to_vmem [thread:$0]  %s0, 128, %s17, [#allocation3], 64, 64, 4
    $region5: #{tpu_custom_call.1} parent=1 // pred_fallthru
      _
    // Predicated region
    $region6: #{tpu_custom_call.1} parent=1 // pred_check
      _
    $region7: #{tpu_custom_call.1} parent=1 // pred_check_branch
      %24 = sbr.rel (0) target = $region9
    $region8: #{tpu_custom_call.1} parent=1 // pred_region
      %s26 = ssub.s32 1024, 1024
      %27 = vsyncadd [#allocation6], %s26
      %s28 = sshll.u32 [#allocation5], 4
      %s29 = int_to_ptr.vmem [resolvable:$true] %s28
      %34 = dma.hbm_to_vmem [thread:$0]  %s1, 1024, %s29, [#allocation6], 128, 128, 8
    $region9: #{tpu_custom_call.1} parent=1 // pred_fallthru
      _
    // Predicated region
    $region10: #{tpu_custom_call.1} parent=1 // pred_check
      _
    $region11: #{tpu_custom_call.1} parent=1 // pred_check_branch
      %36 = sbr.rel (0) target = $region13
    $region12: #{tpu_custom_call.1} parent=1 // pred_region
      %s38 = ssub.s32 1024, 1024
      %39 = vsyncadd [#allocation6], %s38
      %s40 = sshll.u32 [#allocation7], 4
      %s41 = int_to_ptr.vmem [resolvable:$true] %s40
      %46 = dma.hbm_to_vmem [thread:$0]  %s2, 1024, %s41, [#allocation6], 128, 128, 8
    $region13: #{tpu_custom_call.1} parent=1 // pred_fallthru
      _
    // Predicated region
    $region14: #{tpu_custom_call.1} parent=1 // pred_check
      _
    $region15: #{tpu_custom_call.1} parent=1 // pred_check_branch
      %48 = sbr.rel (0) target = $region17
    $region16: #{tpu_custom_call.1} parent=1 // pred_region
      %49 = dma.done [#allocation3], 128
    $region17: #{tpu_custom_call.1} parent=1 // pred_fallthru
      _
    // Predicated region
    $region18: #{tpu_custom_call.1} parent=1 // pred_check
      _
    $region19: #{tpu_custom_call.1} parent=1 // pred_check_branch
      %51 = sbr.rel (0) target = $region21
    $region20: #{tpu_custom_call.1} parent=1 // pred_region
      %52 = dma.done [#allocation6], 1024
    $region21: #{tpu_custom_call.1} parent=1 // pred_fallthru
      _
    // Predicated region
    $region22: #{tpu_custom_call.1} parent=1 // pred_check
      _
    $region23: #{tpu_custom_call.1} parent=1 // pred_check_branch
      %54 = sbr.rel (0) target = $region25
    $region24: #{tpu_custom_call.1} parent=1 // pred_region
      %55 = dma.done [#allocation6], 1024
    $region25: #{tpu_custom_call.1} parent=1 // pred_fallthru
      _
    %v56 = vld [vmem:[#allocation5] sm:$0xff]
    %v57 = vld [vmem:[#allocation5 + $0x8] sm:$0xff]
    %v58 = vld [vmem:[#allocation5 + $0x10] sm:$0xff]
    %v59 = vld [vmem:[#allocation5 + $0x18] sm:$0xff]
    %v60 = vld [vmem:[#allocation5 + $0x20] sm:$0xff]
    %v61 = vld [vmem:[#allocation5 + $0x28] sm:$0xff]
    %v62 = vld [vmem:[#allocation5 + $0x30] sm:$0xff]
    %v63 = vld [vmem:[#allocation5 + $0x38] sm:$0xff]
    %v64 = vld [vmem:[#allocation7] sm:$0xff]
    %v65 = vld [vmem:[#allocation7 + $0x8] sm:$0xff]
    %v66 = vld [vmem:[#allocation7 + $0x10] sm:$0xff]
    %v67 = vld [vmem:[#allocation7 + $0x18] sm:$0xff]
    %v68 = vld [vmem:[#allocation7 + $0x20] sm:$0xff]
    %v69 = vld [vmem:[#allocation7 + $0x28] sm:$0xff]
    %v70 = vld [vmem:[#allocation7 + $0x30] sm:$0xff]
    %v71 = vld [vmem:[#allocation7 + $0x38] sm:$0xff]
    %v72 = vld [vmem:[#allocation2] sm:$0xf]
    %74 = vset.pattern.permute.xlu0 0
    %75 = vperm.xlu0 %74, %v56
    %v76 = vpop.permute.xlu0 %75
    %79 = vset.pattern.permute.xlu0 0
    %80 = vperm.xlu0 %79, %v57
    %v81 = vpop.permute.xlu0 %80
    %84 = vset.pattern.permute.xlu0 0
    %85 = vperm.xlu0 %84, %v58
    %v86 = vpop.permute.xlu0 %85
    %89 = vset.pattern.permute.xlu0 0
    %90 = vperm.xlu0 %89, %v59
    %v91 = vpop.permute.xlu0 %90
    %94 = vset.pattern.permute.xlu0 0
    %95 = vperm.xlu0 %94, %v60
    %v96 = vpop.permute.xlu0 %95
    %99 = vset.pattern.permute.xlu0 0
    %100 = vperm.xlu0 %99, %v61
    %v101 = vpop.permute.xlu0 %100
    %104 = vset.pattern.permute.xlu0 0
    %105 = vperm.xlu0 %104, %v62
    %v106 = vpop.permute.xlu0 %105
    %109 = vset.pattern.permute.xlu0 0
    %110 = vperm.xlu0 %109, %v63
    %v111 = vpop.permute.xlu0 %110
    %v113 = vlaneseq
    %v114 = vshrl.u32 %v113, 7
    %v115 = vsub.s32 0, %v114
    %v116 = vrot.slane %v72, %v115
    %v117 = vmul.f32 %v76, %v116
    %v118 = vmul.f32 %v81, %v116
    %v119 = vmul.f32 %v86, %v116
    %v120 = vmul.f32 %v91, %v116
    %v121 = vmul.f32 %v96, %v116
    %v122 = vmul.f32 %v101, %v116
    %v123 = vmul.f32 %v106, %v116
    %v124 = vmul.f32 %v111, %v116
    %126 = vset.pattern.permute.xlu0 0
    %127 = vperm.xlu0 %126, %v64
    %v128 = vpop.permute.xlu0 %127
    %131 = vset.pattern.permute.xlu0 0
    %132 = vperm.xlu0 %131, %v65
    %v133 = vpop.permute.xlu0 %132
    %136 = vset.pattern.permute.xlu0 0
    %137 = vperm.xlu0 %136, %v66
    %v138 = vpop.permute.xlu0 %137
    %141 = vset.pattern.permute.xlu0 0
    %142 = vperm.xlu0 %141, %v67
    %v143 = vpop.permute.xlu0 %142
    %146 = vset.pattern.permute.xlu0 0
    %147 = vperm.xlu0 %146, %v68
    %v148 = vpop.permute.xlu0 %147
    %151 = vset.pattern.permute.xlu0 0
    %152 = vperm.xlu0 %151, %v69
    %v153 = vpop.permute.xlu0 %152
    %156 = vset.pattern.permute.xlu0 0
    %157 = vperm.xlu0 %156, %v70
    %v158 = vpop.permute.xlu0 %157
    %161 = vset.pattern.permute.xlu0 0
    %162 = vperm.xlu0 %161, %v71
    %v163 = vpop.permute.xlu0 %162
    %v165 = vadd.f32 %v128, %v117
    %v166 = vadd.f32 %v133, %v118
    %v167 = vadd.f32 %v138, %v119
    %v168 = vadd.f32 %v143, %v120
    %v169 = vadd.f32 %v148, %v121
    %v170 = vadd.f32 %v153, %v122
    %v171 = vadd.f32 %v158, %v123
    %v172 = vadd.f32 %v163, %v124
    %173 = vset.pattern.permute.xlu0 1
    %174 = vperm.xlu0 %173, %v56
    %v175 = vpop.permute.xlu0 %174
    %177 = vset.pattern.permute.xlu0 1
    %178 = vperm.xlu0 %177, %v57
    %v179 = vpop.permute.xlu0 %178
    %181 = vset.pattern.permute.xlu0 1
    %182 = vperm.xlu0 %181, %v58
    %v183 = vpop.permute.xlu0 %182
    %185 = vset.pattern.permute.xlu0 1
    %186 = vperm.xlu0 %185, %v59
    %v187 = vpop.permute.xlu0 %186
    %189 = vset.pattern.permute.xlu0 1
    %190 = vperm.xlu0 %189, %v60
    %v191 = vpop.permute.xlu0 %190
    %193 = vset.pattern.permute.xlu0 1
    %194 = vperm.xlu0 %193, %v61
    %v195 = vpop.permute.xlu0 %194
    %197 = vset.pattern.permute.xlu0 1
    %198 = vperm.xlu0 %197, %v62
    %v199 = vpop.permute.xlu0 %198
    %201 = vset.pattern.permute.xlu0 1
    %202 = vperm.xlu0 %201, %v63
    %v203 = vpop.permute.xlu0 %202
    %v205 = vlaneseq
    %v206 = vshrl.u32 %v205, 7
    %v207 = vsub.s32 1, %v206
    %v208 = vrot.slane %v72, %v207
    %v209 = vmul.f32 %v175, %v208
    %v210 = vmul.f32 %v179, %v208
    %v211 = vmul.f32 %v183, %v208
    %v212 = vmul.f32 %v187, %v208
    %v213 = vmul.f32 %v191, %v208
    %v214 = vmul.f32 %v195, %v208
    %v215 = vmul.f32 %v199, %v208
    %v216 = vmul.f32 %v203, %v208
    %v217 = vadd.f32 %v165, %v209
    %v218 = vadd.f32 %v166, %v210
    %v219 = vadd.f32 %v167, %v211
    %v220 = vadd.f32 %v168, %v212
    %v221 = vadd.f32 %v169, %v213
    %v222 = vadd.f32 %v170, %v214
    %v223 = vadd.f32 %v171, %v215
    %v224 = vadd.f32 %v172, %v216
    %225 = vset.pattern.permute.xlu0 2
    %226 = vperm.xlu0 %225, %v56
    %v227 = vpop.permute.xlu0 %226
    %229 = vset.pattern.permute.xlu0 2
    %230 = vperm.xlu0 %229, %v57
    %v231 = vpop.permute.xlu0 %230
    %233 = vset.pattern.permute.xlu0 2
    %234 = vperm.xlu0 %233, %v58
    %v235 = vpop.permute.xlu0 %234
    %237 = vset.pattern.permute.xlu0 2
    %238 = vperm.xlu0 %237, %v59
    %v239 = vpop.permute.xlu0 %238
    %241 = vset.pattern.permute.xlu0 2
    %242 = vperm.xlu0 %241, %v60
    %v243 = vpop.permute.xlu0 %242
    %245 = vset.pattern.permute.xlu0 2
    %246 = vperm.xlu0 %245, %v61
    %v247 = vpop.permute.xlu0 %246
    %249 = vset.pattern.permute.xlu0 2
    %250 = vperm.xlu0 %249, %v62
    %v251 = vpop.permute.xlu0 %250
    %253 = vset.pattern.permute.xlu0 2
    %254 = vperm.xlu0 %253, %v63
    %v255 = vpop.permute.xlu0 %254
    %v257 = vlaneseq
    %v258 = vshrl.u32 %v257, 7
    %v259 = vsub.s32 2, %v258
    %v260 = vrot.slane %v72, %v259
    %v261 = vmul.f32 %v227, %v260
    %v262 = vmul.f32 %v231, %v260
    %v263 = vmul.f32 %v235, %v260
    %v264 = vmul.f32 %v239, %v260
    %v265 = vmul.f32 %v243, %v260
    %v266 = vmul.f32 %v247, %v260
    %v267 = vmul.f32 %v251, %v260
    %v268 = vmul.f32 %v255, %v260
    %v269 = vadd.f32 %v217, %v261
    %v270 = vadd.f32 %v218, %v262
    %v271 = vadd.f32 %v219, %v263
    %v272 = vadd.f32 %v220, %v264
    %v273 = vadd.f32 %v221, %v265
    %v274 = vadd.f32 %v222, %v266
    %v275 = vadd.f32 %v223, %v267
    %v276 = vadd.f32 %v224, %v268
    %277 = vset.pattern.permute.xlu0 3
    %278 = vperm.xlu0 %277, %v56
    %v279 = vpop.permute.xlu0 %278
    %281 = vset.pattern.permute.xlu0 3
    %282 = vperm.xlu0 %281, %v57
    %v283 = vpop.permute.xlu0 %282
    %285 = vset.pattern.permute.xlu0 3
    %286 = vperm.xlu0 %285, %v58
    %v287 = vpop.permute.xlu0 %286
    %289 = vset.pattern.permute.xlu0 3
    %290 = vperm.xlu0 %289, %v59
    %v291 = vpop.permute.xlu0 %290
    %293 = vset.pattern.permute.xlu0 3
    %294 = vperm.xlu0 %293, %v60
    %v295 = vpop.permute.xlu0 %294
    %297 = vset.pattern.permute.xlu0 3
    %298 = vperm.xlu0 %297, %v61
    %v299 = vpop.permute.xlu0 %298
    %301 = vset.pattern.permute.xlu0 3
    %302 = vperm.xlu0 %301, %v62
    %v303 = vpop.permute.xlu0 %302
    %305 = vset.pattern.permute.xlu0 3
    %306 = vperm.xlu0 %305, %v63
    %v307 = vpop.permute.xlu0 %306
    %v309 = vlaneseq
    %v310 = vshrl.u32 %v309, 7
    %v311 = vsub.s32 3, %v310
    %v312 = vrot.slane %v72, %v311
    %v313 = vmul.f32 %v279, %v312
    %v314 = vmul.f32 %v283, %v312
    %v315 = vmul.f32 %v287, %v312
    %v316 = vmul.f32 %v291, %v312
    %v317 = vmul.f32 %v295, %v312
    %v318 = vmul.f32 %v299, %v312
    %v319 = vmul.f32 %v303, %v312
    %v320 = vmul.f32 %v307, %v312
    %v321 = vadd.f32 %v269, %v313
    %v322 = vadd.f32 %v270, %v314
    %v323 = vadd.f32 %v271, %v315
    %v324 = vadd.f32 %v272, %v316
    %v325 = vadd.f32 %v273, %v317
    %v326 = vadd.f32 %v274, %v318
    %v327 = vadd.f32 %v275, %v319
    %v328 = vadd.f32 %v276, %v320
    %329 = vst [vmem:[#allocation8] sm:$0xff] %v321
    %330 = vst [vmem:[#allocation8 + $0x8] sm:$0xff] %v322
    %331 = vst [vmem:[#allocation8 + $0x10] sm:$0xff] %v323
    %332 = vst [vmem:[#allocation8 + $0x18] sm:$0xff] %v324
    %333 = vst [vmem:[#allocation8 + $0x20] sm:$0xff] %v325
    %334 = vst [vmem:[#allocation8 + $0x28] sm:$0xff] %v326
    %335 = vst [vmem:[#allocation8 + $0x30] sm:$0xff] %v327
    %336 = vst [vmem:[#allocation8 + $0x38] sm:$0xff] %v328
    %s337 = scalar_lea.vmem [#allocation2], 4
    %v338 = vld [vmem:[%s337] sm:$0xf]
    %v339 = vlaneseq
    %v340 = vshrl.u32 %v339, 7
    %v341 = vsub.s32 0, %v340
    %v342 = vrot.slane %v338, %v341
    %v343 = vmul.f32 %v76, %v342
    %v344 = vmul.f32 %v81, %v342
    %v345 = vmul.f32 %v86, %v342
    %v346 = vmul.f32 %v91, %v342
    %v347 = vmul.f32 %v96, %v342
    %v348 = vmul.f32 %v101, %v342
    %v349 = vmul.f32 %v106, %v342
    %v350 = vmul.f32 %v111, %v342
    %v351 = vadd.f32 %v128, %v343
    %v352 = vadd.f32 %v133, %v344
    %v353 = vadd.f32 %v138, %v345
    %v354 = vadd.f32 %v143, %v346
    %v355 = vadd.f32 %v148, %v347
    %v356 = vadd.f32 %v153, %v348
    %v357 = vadd.f32 %v158, %v349
    %v358 = vadd.f32 %v163, %v350
    %v359 = vlaneseq
    %v360 = vshrl.u32 %v359, 7
    %v361 = vsub.s32 1, %v360
    %v362 = vrot.slane %v338, %v361
    %v363 = vmul.f32 %v175, %v362
    %v364 = vmul.f32 %v179, %v362
    %v365 = vmul.f32 %v183, %v362
    %v366 = vmul.f32 %v187, %v362
    %v367 = vmul.f32 %v191, %v362
    %v368 = vmul.f32 %v195, %v362
    %v369 = vmul.f32 %v199, %v362
    %v370 = vmul.f32 %v203, %v362
    %v371 = vadd.f32 %v351, %v363
    %v372 = vadd.f32 %v352, %v364
    %v373 = vadd.f32 %v353, %v365
    %v374 = vadd.f32 %v354, %v366
    %v375 = vadd.f32 %v355, %v367
    %v376 = vadd.f32 %v356, %v368
    %v377 = vadd.f32 %v357, %v369
    %v378 = vadd.f32 %v358, %v370
    %v379 = vlaneseq
    %v380 = vshrl.u32 %v379, 7
    %v381 = vsub.s32 2, %v380
    %v382 = vrot.slane %v338, %v381
    %v383 = vmul.f32 %v227, %v382
    %v384 = vmul.f32 %v231, %v382
    %v385 = vmul.f32 %v235, %v382
    %v386 = vmul.f32 %v239, %v382
    %v387 = vmul.f32 %v243, %v382
    %v388 = vmul.f32 %v247, %v382
    %v389 = vmul.f32 %v251, %v382
    %v390 = vmul.f32 %v255, %v382
    %v391 = vadd.f32 %v371, %v383
    %v392 = vadd.f32 %v372, %v384
    %v393 = vadd.f32 %v373, %v385
    %v394 = vadd.f32 %v374, %v386
    %v395 = vadd.f32 %v375, %v387
    %v396 = vadd.f32 %v376, %v388
    %v397 = vadd.f32 %v377, %v389
    %v398 = vadd.f32 %v378, %v390
    %v399 = vlaneseq
    %v400 = vshrl.u32 %v399, 7
    %v401 = vsub.s32 3, %v400
    %v402 = vrot.slane %v338, %v401
    %v403 = vmul.f32 %v279, %v402
    %v404 = vmul.f32 %v283, %v402
    %v405 = vmul.f32 %v287, %v402
    %v406 = vmul.f32 %v291, %v402
    %v407 = vmul.f32 %v295, %v402
    %v408 = vmul.f32 %v299, %v402
    %v409 = vmul.f32 %v303, %v402
    %v410 = vmul.f32 %v307, %v402
    %v411 = vadd.f32 %v391, %v403
    %v412 = vadd.f32 %v392, %v404
    %v413 = vadd.f32 %v393, %v405
    %v414 = vadd.f32 %v394, %v406
    %v415 = vadd.f32 %v395, %v407
    %v416 = vadd.f32 %v396, %v408
    %v417 = vadd.f32 %v397, %v409
    %v418 = vadd.f32 %v398, %v410
    %s419 = scalar_lea.vmem [#allocation8], 64
    %420 = vst [vmem:[%s419] sm:$0xff] %v411
    %421 = vst [vmem:[%s419 + $0x8] sm:$0xff] %v412
    %422 = vst [vmem:[%s419 + $0x10] sm:$0xff] %v413
    %423 = vst [vmem:[%s419 + $0x18] sm:$0xff] %v414
    %424 = vst [vmem:[%s419 + $0x20] sm:$0xff] %v415
    %425 = vst [vmem:[%s419 + $0x28] sm:$0xff] %v416
    %426 = vst [vmem:[%s419 + $0x30] sm:$0xff] %v417
    %427 = vst [vmem:[%s419 + $0x38] sm:$0xff] %v418
    // Predicated region
    $region26: #{tpu_custom_call.1} parent=1 // pred_check
      _
    $region27: #{tpu_custom_call.1} parent=1 // pred_check_branch
      %429 = sbr.rel (0) target = $region29
    $region28: #{tpu_custom_call.1} parent=1 // pred_region
      %s431 = ssub.s32 2048, 2048
      %432 = vsyncadd [#allocation4], %s431
      %s433 = sshll.u32 [#allocation8], 4
      %s434 = int_to_ptr.vmem [resolvable:$true] %s433
      %439 = dma.vmem_to_hbm [thread:$0]  %s434, 2048, %s3, [#allocation4], 128, 128, 8
    $region29: #{tpu_custom_call.1} parent=1 // pred_fallthru
      _
    // Predicated region
    $region30: #{tpu_custom_call.1} parent=1 // pred_check
      _
    $region31: #{tpu_custom_call.1} parent=1 // pred_check_branch
      %441 = sbr.rel (0) target = $region33
    $region32: #{tpu_custom_call.1} parent=1 // pred_region
      %442 = dma.done [#allocation4], 2048
    $region33: #{tpu_custom_call.1} parent=1 // pred_fallthru
      _
    %443 = vsyncpa [#allocation3], 1
    %444 = vsyncpa [#allocation6], 1
    %445 = vsyncpa [#allocation4], 1

</llo_original>
